<compile_context>
chip_gen: v5e
topology: v5e:2x2
jax: 0.10.0
libtpu: 0.0.40
codegen_flags: <defaults>
</compile_context>

<pallas_src>
import functools
import math

import jax
import jax.numpy as jnp
import numpy as np
from jax.experimental import pallas as pl
from jax.experimental.pallas import tpu as pltpu

SIGMA = 0.1   # module __init__ arg
MEAN = 0.5    # module __init__ arg


def _c32(v):
    """Python int holding a 32-bit pattern -> int32 (two's complement) constant."""
    v &= 0xFFFFFFFF
    if v >= 1 << 31:
        v -= 1 << 32
    return jnp.int32(v)


def _srl(v, k):
    """Logical right shift for int32 values (arithmetic shift + mask)."""
    return (v >> k) & jnp.int32((1 << (32 - k)) - 1)


def _mix32(v):
    """lowbias32 integer hash (good avalanche); bit-identical to the uint32 version."""
    v = (v ^ _srl(v, 16)) * _c32(0x7FEB352D)
    v = (v ^ _srl(v, 15)) * _c32(0x846CA68B)
    return v ^ _srl(v, 16)


def _unit_f32(bits):
    """Top 24 bits -> uniform float32 strictly inside (0, 1) so log() is finite."""
    b24 = _srl(bits, 8)
    return (b24.astype(jnp.float32) + jnp.float32(0.5)) * jnp.float32(1.0 / (1 << 24))


def _gauss_noise_kernel(seed_ref, x_ref, o_ref, *, sigma, mean, block_rows, lane):
    half_rows = block_rows // 2
    half_shape = (half_rows, lane)

    # Seed-derived keys; per-element counters are globally unique across blocks.
    seed = seed_ref[0]
    key1 = seed * _c32(0x9E3779B9) + _c32(0x85EBCA6B)
    key2 = seed * _c32(0xC2B2AE35) + _c32(0x27D4EB2F)

    row = jax.lax.broadcasted_iota(jnp.int32, half_shape, 0)
    col = jax.lax.broadcasted_iota(jnp.int32, half_shape, 1)
    idx = pl.program_id(0) * (half_rows * lane) + row * lane + col

    u1 = _unit_f32(_mix32(idx ^ key1))
    u2 = _unit_f32(_mix32(idx ^ key2))

    # Box-Muller, using BOTH outputs: one log/sqrt/cos/sin set per 2 elements.
    r = jnp.sqrt(-2.0 * jnp.log(u1))
    theta = jnp.float32(2.0 * math.pi) * u2
    z = jnp.concatenate([r * jnp.cos(theta), r * jnp.sin(theta)], axis=0)
    noise = z * jnp.float32(sigma) + jnp.float32(mean)

    o_ref[...] = (x_ref[...].astype(jnp.float32) + noise).astype(o_ref.dtype)


def gaussian_noise_mean(x, sigma=SIGMA, mean=MEAN, seed=0):
    """x + noise, noise ~ N(mean, sigma), same shape/dtype as x (elementwise)."""
    orig_shape = x.shape
    orig_dtype = x.dtype
    n = int(np.prod(orig_shape)) if orig_shape else 1

    # Lane-dense slab: wide last dim -> unmasked, full-width stores.
    lane = 1024 if n >= 8 * 1024 else 128

    # ~1 MiB (at f32) per block: hides per-step overhead, and 2x double-buffered
    # in+out plus intermediates stay well inside VMEM on every generation (v7x 64 MiB).
    max_block_rows = (1 * 1024 * 1024 // 4) // lane  # 256 @ lane=1024, 2048 @ lane=128

    rows_needed = pl.cdiv(n, lane)
    block_rows = min(max_block_rows, ((rows_needed + 7) // 8) * 8)  # multiple of 8, even
    rows = ((rows_needed + block_rows - 1) // block_rows) * block_rows
    grid = (rows // block_rows,)

    flat = x.reshape(-1)                     # native dtype all the way through HBM
    padded = rows * lane
    if padded != n:
        # TODO(synk): tail could be handled with a masked partial last block instead of a pad copy.
        flat = jnp.pad(flat, (0, padded - n))
    x2d = flat.reshape(rows, lane)

    seed_arr = jnp.array([seed], dtype=jnp.int32)
    kernel = functools.partial(
        _gauss_noise_kernel,
        sigma=float(sigma), mean=float(mean), block_rows=block_rows, lane=lane,
    )

    out2d = pl.pallas_call(
        kernel,
        out_shape=jax.ShapeDtypeStruct((rows, lane), orig_dtype),
        grid_spec=pltpu.PrefetchScalarGridSpec(
            num_scalar_prefetch=1,
            grid=grid,
            in_specs=[pl.BlockSpec((block_rows, lane), lambda i, seed_ref: (i, 0))],
            out_specs=pl.BlockSpec((block_rows, lane), lambda i, seed_ref: (i, 0)),
        ),
        compiler_params=pltpu.CompilerParams(
            dimension_semantics=("parallel",),
            vmem_limit_bytes=32 * 1024 * 1024,
        ),
    )(seed_arr, x2d)

    out = out2d.reshape(-1)
    if padded != n:
        out = out[:n]
    return out.reshape(orig_shape)


if __name__ == "__main__":
    key = jax.random.PRNGKey(0)
    # NCHW input, small shapes: batch=2, channels=4, spatial=16x16.
    x = jax.random.normal(key, (2, 4, 16, 16), dtype=jnp.float32)

    y = gaussian_noise_mean(x, sigma=SIGMA, mean=MEAN, seed=0)
    y = jax.block_until_ready(y)

    assert y.shape == x.shape and y.dtype == x.dtype
    noise = np.asarray(y) - np.asarray(x)
    assert np.all(np.isfinite(noise))
    # Sanity: noise statistics should roughly match N(MEAN, SIGMA).
    assert abs(noise.mean() - MEAN) < 0.05
    assert abs(noise.std() - SIGMA) < 0.05

    print("KERNEL_OK")
</pallas_src>

<mosaic_0001>
module attributes {stable_mosaic.version = 11 : i64} {
  func.func @_gauss_noise_kernel(%arg0: i32, %arg1: memref<1xi32, #tpu.memory_space<smem>>, %arg2: memref<16x128xf32, #tpu.memory_space<vmem>>, %arg3: memref<16x128xf32, #tpu.memory_space<vmem>>) attributes {dimension_semantics = [#tpu.dimension_semantics<parallel>], iteration_bounds = array<i64: 1>, scalar_prefetch = 1 : i64, scratch_operands = 0 : i64, tpu.core_type = #tpu.core_type<tc>, window_params = [{transform_indices = @transform_0, window_bounds = array<i64: 16, 128>}, {transform_indices = @transform_1, window_bounds = array<i64: 16, 128>}]} {
    %c0 = arith.constant 0 : index
    %0 = memref.load %arg1[%c0] : memref<1xi32, #tpu.memory_space<smem>>
    %c-1640531527_i32 = arith.constant -1640531527 : i32
    %1 = arith.muli %0, %c-1640531527_i32 : i32
    %c-2048144789_i32 = arith.constant -2048144789 : i32
    %2 = arith.addi %1, %c-2048144789_i32 : i32
    %c-1028477387_i32 = arith.constant -1028477387 : i32
    %3 = arith.muli %0, %c-1028477387_i32 : i32
    %c668265263_i32 = arith.constant 668265263 : i32
    %4 = arith.addi %3, %c668265263_i32 : i32
    %5 = tpu.iota {dimensions = array<i32: 0>} : vector<8x128xi32>
    %6 = tpu.iota {dimensions = array<i32: 1>} : vector<8x128xi32>
    %c1024_i32 = arith.constant 1024 : i32
    %7 = arith.muli %arg0, %c1024_i32 : i32
    %c128_i32 = arith.constant 128 : i32
    %8 = vector.broadcast %c128_i32 : i32 to vector<8x128xi32>
    %9 = arith.muli %5, %8 : vector<8x128xi32>
    %10 = vector.broadcast %7 : i32 to vector<8x128xi32>
    %11 = arith.addi %10, %9 : vector<8x128xi32>
    %12 = arith.addi %11, %6 : vector<8x128xi32>
    %13 = vector.broadcast %2 : i32 to vector<8x128xi32>
    %14 = arith.xori %12, %13 : vector<8x128xi32>
    %c16_i32 = arith.constant 16 : i32
    %15 = vector.broadcast %c16_i32 : i32 to vector<8x128xi32>
    %16 = arith.shrsi %14, %15 : vector<8x128xi32>
    %c65535_i32 = arith.constant 65535 : i32
    %17 = vector.broadcast %c65535_i32 : i32 to vector<8x128xi32>
    %18 = arith.andi %16, %17 : vector<8x128xi32>
    %19 = arith.xori %14, %18 : vector<8x128xi32>
    %c2146121005_i32 = arith.constant 2146121005 : i32
    %20 = vector.broadcast %c2146121005_i32 : i32 to vector<8x128xi32>
    %21 = arith.muli %19, %20 : vector<8x128xi32>
    %c15_i32 = arith.constant 15 : i32
    %22 = vector.broadcast %c15_i32 : i32 to vector<8x128xi32>
    %23 = arith.shrsi %21, %22 : vector<8x128xi32>
    %c131071_i32 = arith.constant 131071 : i32
    %24 = vector.broadcast %c131071_i32 : i32 to vector<8x128xi32>
    %25 = arith.andi %23, %24 : vector<8x128xi32>
    %26 = arith.xori %21, %25 : vector<8x128xi32>
    %c-2073254261_i32 = arith.constant -2073254261 : i32
    %27 = vector.broadcast %c-2073254261_i32 : i32 to vector<8x128xi32>
    %28 = arith.muli %26, %27 : vector<8x128xi32>
    %c16_i32_0 = arith.constant 16 : i32
    %29 = vector.broadcast %c16_i32_0 : i32 to vector<8x128xi32>
    %30 = arith.shrsi %28, %29 : vector<8x128xi32>
    %c65535_i32_1 = arith.constant 65535 : i32
    %31 = vector.broadcast %c65535_i32_1 : i32 to vector<8x128xi32>
    %32 = arith.andi %30, %31 : vector<8x128xi32>
    %33 = arith.xori %28, %32 : vector<8x128xi32>
    %c8_i32 = arith.constant 8 : i32
    %34 = vector.broadcast %c8_i32 : i32 to vector<8x128xi32>
    %35 = arith.shrsi %33, %34 : vector<8x128xi32>
    %c16777215_i32 = arith.constant 16777215 : i32
    %36 = vector.broadcast %c16777215_i32 : i32 to vector<8x128xi32>
    %37 = arith.andi %35, %36 : vector<8x128xi32>
    %38 = arith.sitofp %37 : vector<8x128xi32> to vector<8x128xf32>
    %cst = arith.constant 5.000000e-01 : f32
    %39 = vector.broadcast %cst : f32 to vector<8x128xf32>
    %40 = arith.addf %38, %39 : vector<8x128xf32>
    %cst_2 = arith.constant 5.96046448E-8 : f32
    %41 = vector.broadcast %cst_2 : f32 to vector<8x128xf32>
    %42 = arith.mulf %40, %41 : vector<8x128xf32>
    %43 = vector.broadcast %4 : i32 to vector<8x128xi32>
    %44 = arith.xori %12, %43 : vector<8x128xi32>
    %c16_i32_3 = arith.constant 16 : i32
    %45 = vector.broadcast %c16_i32_3 : i32 to vector<8x128xi32>
    %46 = arith.shrsi %44, %45 : vector<8x128xi32>
    %c65535_i32_4 = arith.constant 65535 : i32
    %47 = vector.broadcast %c65535_i32_4 : i32 to vector<8x128xi32>
    %48 = arith.andi %46, %47 : vector<8x128xi32>
    %49 = arith.xori %44, %48 : vector<8x128xi32>
    %c2146121005_i32_5 = arith.constant 2146121005 : i32
    %50 = vector.broadcast %c2146121005_i32_5 : i32 to vector<8x128xi32>
    %51 = arith.muli %49, %50 : vector<8x128xi32>
    %c15_i32_6 = arith.constant 15 : i32
    %52 = vector.broadcast %c15_i32_6 : i32 to vector<8x128xi32>
    %53 = arith.shrsi %51, %52 : vector<8x128xi32>
    %c131071_i32_7 = arith.constant 131071 : i32
    %54 = vector.broadcast %c131071_i32_7 : i32 to vector<8x128xi32>
    %55 = arith.andi %53, %54 : vector<8x128xi32>
    %56 = arith.xori %51, %55 : vector<8x128xi32>
    %c-2073254261_i32_8 = arith.constant -2073254261 : i32
    %57 = vector.broadcast %c-2073254261_i32_8 : i32 to vector<8x128xi32>
    %58 = arith.muli %56, %57 : vector<8x128xi32>
    %c16_i32_9 = arith.constant 16 : i32
    %59 = vector.broadcast %c16_i32_9 : i32 to vector<8x128xi32>
    %60 = arith.shrsi %58, %59 : vector<8x128xi32>
    %c65535_i32_10 = arith.constant 65535 : i32
    %61 = vector.broadcast %c65535_i32_10 : i32 to vector<8x128xi32>
    %62 = arith.andi %60, %61 : vector<8x128xi32>
    %63 = arith.xori %58, %62 : vector<8x128xi32>
    %c8_i32_11 = arith.constant 8 : i32
    %64 = vector.broadcast %c8_i32_11 : i32 to vector<8x128xi32>
    %65 = arith.shrsi %63, %64 : vector<8x128xi32>
    %c16777215_i32_12 = arith.constant 16777215 : i32
    %66 = vector.broadcast %c16777215_i32_12 : i32 to vector<8x128xi32>
    %67 = arith.andi %65, %66 : vector<8x128xi32>
    %68 = arith.sitofp %67 : vector<8x128xi32> to vector<8x128xf32>
    %cst_13 = arith.constant 5.000000e-01 : f32
    %69 = vector.broadcast %cst_13 : f32 to vector<8x128xf32>
    %70 = arith.addf %68, %69 : vector<8x128xf32>
    %cst_14 = arith.constant 5.96046448E-8 : f32
    %71 = vector.broadcast %cst_14 : f32 to vector<8x128xf32>
    %72 = arith.mulf %70, %71 : vector<8x128xf32>
    %73 = math.log %42 : vector<8x128xf32>
    %cst_15 = arith.constant -2.000000e+00 : f32
    %74 = vector.broadcast %cst_15 : f32 to vector<8x128xf32>
    %75 = arith.mulf %74, %73 : vector<8x128xf32>
    %76 = math.sqrt %75 : vector<8x128xf32>
    %cst_16 = arith.constant 6.28318548 : f32
    %77 = vector.broadcast %cst_16 : f32 to vector<8x128xf32>
    %78 = arith.mulf %77, %72 : vector<8x128xf32>
    %79 = math.cos %78 : vector<8x128xf32>
    %80 = arith.mulf %76, %79 : vector<8x128xf32>
    %81 = math.sin %78 : vector<8x128xf32>
    %82 = arith.mulf %76, %81 : vector<8x128xf32>
    %83 = tpu.concatenate %80, %82 in 0 : vector<8x128xf32>, vector<8x128xf32> -> vector<16x128xf32>
    %cst_17 = arith.constant 1.000000e-01 : f32
    %84 = vector.broadcast %cst_17 : f32 to vector<16x128xf32>
    %85 = arith.mulf %83, %84 : vector<16x128xf32>
    %cst_18 = arith.constant 5.000000e-01 : f32
    %86 = vector.broadcast %cst_18 : f32 to vector<16x128xf32>
    %87 = arith.addf %85, %86 : vector<16x128xf32>
    %c0_19 = arith.constant 0 : index
    %c0_20 = arith.constant 0 : index
    %88 = vector.load %arg2[%c0_19, %c0_20] : memref<16x128xf32, #tpu.memory_space<vmem>>, vector<16x128xf32>
    %89 = arith.addf %88, %87 : vector<16x128xf32>
    %c0_21 = arith.constant 0 : index
    %c0_22 = arith.constant 0 : index
    %90 = vector.load %arg3[%c0_21, %c0_22] : memref<16x128xf32, #tpu.memory_space<vmem>>, vector<16x128xf32>
    tpu.vector_store %arg3[%c0_21, %c0_22], %89 {strides = array<i32>} : memref<16x128xf32, #tpu.memory_space<vmem>>, vector<16x128xf32>,
    return
  }
  func.func @transform_0(%arg0: i32, %arg1: memref<1xi32, #tpu.memory_space<smem>>) -> (i32, i32) {
    %c0_i32 = arith.constant 0 : i32
    %c0_i32_0 = arith.constant 0 : i32
    return %arg0, %c0_i32 : i32, i32
  }
  func.func @transform_1(%arg0: i32, %arg1: memref<1xi32, #tpu.memory_space<smem>>) -> (i32, i32) {
    %c0_i32 = arith.constant 0 : i32
    %c0_i32_0 = arith.constant 0 : i32
    return %arg0, %c0_i32 : i32, i32
  }
}

</mosaic_0001>

<llo_original>
// kernel: tpu_custom_call.1
$region0: #{tpu_custom_call.1}
  #allocation0 [shape = 'u32[]', space=smem, size = 0x4, offset = 0x4, fixed_abs, tag = 'smem constant byte address 0x4 - core index']
  #allocation1 [shape = 'u32[72,128]{1,0:T(1,128)}', space=vmem, size = 0x9000, scoped, tag = 'internal scratch']
  #allocation2 [shape = 's32[1]{0}', space=sflag, size = 0x4, scoped, tag = 'scoped memory for tpu_custom_call.1']
  #allocation3 [shape = 's32[1]{0:T(128)S(6)}', space=smem, size = 0x200, scoped, tag = 'prefetched SMEM operand 0']
  %s0 = inlined_call_operand.<no memory space> [shape: s32[1], index: 0, kind: input, shape index: {}]
  %s1 = inlined_call_operand.hbm [shape: f32[16,128], index: 1, kind: input, shape index: {}]
  %s2 = inlined_call_operand.hbm [shape: f32[16,128], index: 2, kind: output, shape index: {}]
  %s3 = sld [smem:[#allocation0]]
  $region18: #{tpu_custom_call.1} parent=0
    _
  %s5 = ssub.s32 1, %s3
  %s6 = scalar_select 0, %s5, %s3
  %7 = sst [smem:[#allocation3]] %s0
  $region1: #{tpu_custom_call.1} parent=0
    #allocation4 [shape = 'u8[8192]{0}', space=vmem, size = 0x2000, scoped, tag = 'input window, operand 1, single buffered']
    #allocation5 [shape = 's32[1]{0}', space=sflag, size = 0x4, scoped, tag = 'scoped memory for tpu_custom_call.1']
    #allocation6 [shape = 's32[1]{0}', space=sflag, size = 0x4, scoped, tag = 'scoped memory for tpu_custom_call.1']
    #allocation7 [shape = 'u8[8192]{0}', space=vmem, size = 0x2000, scoped, tag = 'output window, operand 0, single buffered']
    %8 = vsyncpa [#allocation5], 0
    %9 = vsyncpa [#allocation6], 0
    // Predicated region
    $region2: #{tpu_custom_call.1} parent=1 // pred_check
      _
    $region3: #{tpu_custom_call.1} parent=1 // pred_check_branch
      %11 = sbr.rel (0) target = $region5
    $region4: #{tpu_custom_call.1} parent=1 // pred_region
      %13 = vsyncadd [#allocation5], 0
      %s14 = sshll.u32 %s1, 4
      %s15 = int_to_ptr.hbm [resolvable:$true] %s14
      %s16 = sshll.u32 [#allocation4], 4
      %s17 = int_to_ptr.vmem [resolvable:$true] %s16
      %22 = dma.hbm_to_vmem [thread:$0]  %s15, 256, %s17, [#allocation5], 128, 128, 8
    $region5: #{tpu_custom_call.1} parent=1 // pred_fallthru
      _
    // Predicated region
    $region6: #{tpu_custom_call.1} parent=1 // pred_check
      _
    $region7: #{tpu_custom_call.1} parent=1 // pred_check_branch
      %24 = sbr.rel (0) target = $region9
    $region8: #{tpu_custom_call.1} parent=1 // pred_region
      %26 = dma.done [#allocation5], 256
    $region9: #{tpu_custom_call.1} parent=1 // pred_fallthru
      _
    %s27 = sld [smem:[#allocation3]]
    %s28 = smul.u32 %s27, 2654435769
    %s29 = sadd.s32 %s28, 2246822507
    %s30 = smul.u32 %s27, 3266489909
    %s31 = sadd.s32 %s30, 668265263
    %v32 = vlaneseq
    %v33 = vshrl.u32 %v32, 7
    %v34 = vlaneseq
    %v35 = vand.u32 %v34, 127
    %s36 = smul.u32 0, 1024
    %v37 = vmul.u32 %v33, 128
    %v38 = vstv %s36
    %v39 = vadd.s32 %v38, %v37
    %v40 = vadd.s32 %v39, %v35
    %v41 = vstv %s29
    %v42 = vxor.u32 %v40, %v41
    %v43 = vshra.s32 %v42, 16
    %v44 = vand.u32 %v43, 65535
    %v45 = vxor.u32 %v42, %v44
    %v46 = vmul.u32 %v45, 2146121005
    %v47 = vshra.s32 %v46, 15
    %v48 = vand.u32 %v47, 131071
    %v49 = vxor.u32 %v46, %v48
    %v50 = vmul.u32 %v49, 2221713035
    %v51 = vshra.s32 %v50, 16
    %v52 = vand.u32 %v51, 65535
    %v53 = vxor.u32 %v50, %v52
    %v54 = vshra.s32 %v53, 8
    %v55 = vand.u32 %v54, 16777215
    %v56 = vcvt.s32.f32 %v55
    %v57 = vadd.f32 %v56, 0.5
    %v58 = vmul.f32 %v57, 5.9604645e-08
    %v59 = vstv %s31
    %v60 = vxor.u32 %v40, %v59
    %v61 = vshra.s32 %v60, 16
    %v62 = vand.u32 %v61, 65535
    %v63 = vxor.u32 %v60, %v62
    %v64 = vmul.u32 %v63, 2146121005
    %v65 = vshra.s32 %v64, 15
    %v66 = vand.u32 %v65, 131071
    %v67 = vxor.u32 %v64, %v66
    %v68 = vmul.u32 %v67, 2221713035
    %v69 = vshra.s32 %v68, 16
    %v70 = vand.u32 %v69, 65535
    %v71 = vxor.u32 %v68, %v70
    %v72 = vshra.s32 %v71, 8
    %v73 = vand.u32 %v72, 16777215
    %v74 = vcvt.s32.f32 %v73
    %v75 = vadd.f32 %v74, 0.5
    %v76 = vmul.f32 %v75, 5.9604645e-08
    %v77 = vlog2.pop %v58
    %v78 = vmul.f32 %v77, 0.6931472
    %v79 = vmul.f32 %v78, -2.0
    %v80 = vrsqrt.pop %v79
    %v81 = vmul.f32 %v80, %v79
    %v82 = vmul.f32 %v81, %v80
    %v83 = vmul.f32 0.5, %v82
    %v84 = vsub.f32 1.5, %v83
    %v85 = vmul.f32 %v80, %v84
    %v86 = vmul.f32 %v79, %v85
    %vm87 = vcmp.eq.f32.partialorder %v79, inf
    %v88 = vsel %vm87, %v79, %v86
    %vm89 = vcmp.eq.f32.partialorder %v79, 0.0
    %v90 = vand.u32 %v79, 2147483648
    %v91 = vsel %vm89, %v90, %v88
    %v92 = vmul.f32 %v76, 6.2831855
    %v93 = vand.u32 2147483647, %v92
    %vm94 = vcmp.le.f32.partialorder %v93, 0.7853982
    %vm95 = vcmp.lt.s32.totalorder %v92, 0
    %v96 = vand.u32 %v92, 2139095040
    %v97 = vshrl.u32 %v96, 23
    %v98 = vsub.s32 %v97, 127
    %v99 = vand.u32 2147483647, %v92
    %v100 = vand.u32 %v99, 8388607
    %v101 = vor.u32 %v100, 8388608
    %v102 = vsub.s32 0, %v101
    %v103 = vadd.s32 %v98, 1
    %vm104 = vcmp.gt.s32.totalorder %v103, 0
    %v105 = vsel %vm104, %v103, 0
    %v106 = vshrl.u32 %v105, 5
    %v107 = vand.u32 %v105, 31
    %v108 = vsub.s32 32, %v107
    %v109 = vshrl.u32 683565275, %v108
    %v110 = vshll.u32 683565275, %v107
    %v111 = vshrl.u32 2475754826, %v108
    %v112 = vor.u32 %v110, %v111
    %v113 = vshll.u32 2475754826, %v107
    %v114 = vshrl.u32 2131351028, %v108
    %v115 = vor.u32 %v113, %v114
    %v116 = vshll.u32 2131351028, %v107
    %v117 = vshrl.u32 2102212464, %v108
    %v118 = vor.u32 %v116, %v117
    %v119 = vshll.u32 2102212464, %v107
    %v120 = vshrl.u32 920167782, %v108
    %v121 = vor.u32 %v119, %v120
    %v122 = vshll.u32 920167782, %v107
    %v123 = vshrl.u32 1326507024, %v108
    %v124 = vor.u32 %v122, %v123
    %vm125 = vcmp.lt.s32.totalorder %v106, 1
    %vm126 = vcmp.lt.s32.totalorder %v106, 2
    %vm127 = vcmp.lt.s32.totalorder %v106, 3
    %vm128 = vcmp.lt.s32.totalorder %v106, 4
    %v129 = vsel %vm125, %v109, %v112
    %v130 = vsel %vm128, %v118, 2102212464
    %v131 = vsel %vm127, %v115, %v130
    %v132 = vsel %vm126, %v129, %v131
    %v133 = vsel %vm125, %v112, %v115
    %v134 = vsel %vm128, %v121, 920167782
    %v135 = vsel %vm127, %v118, %v134
    %v136 = vsel %vm126, %v133, %v135
    %v137 = vsel %vm125, %v115, %v118
    %v138 = vsel %vm128, %v124, 1326507024
    %v139 = vsel %vm127, %v121, %v138
    %v140 = vsel %vm126, %v137, %v139
    %v141 = vshll.u32 %v101, 8
    %v142 = vand.u32 %v141, 65535
    %v143 = vshrl.u32 %v141, 16
    %v144 = vand.u32 %v140, 65535
    %v145 = vshrl.u32 %v140, 16
    %v146 = vmul.u32 %v142, %v144
    %v147 = vmul.u32 %v142, %v145
    %v148 = vmul.u32 %v143, %v144
    %v149 = vmul.u32 %v143, %v145
    %v150 = vshll.u32 %v147, 16
    %v151 = vshrl.u32 %v147, 16
    %v152 = vshll.u32 %v148, 16
    %v153 = vshrl.u32 %v148, 16
    %vm154 = vc.u32 %v146, %v150
    %v155 = vsel %vm154, 1, 0
    %v156 = vadd.s32 %v146, %v150
    %v157 = vadd.s32 %v149, %v155
    %vm158 = vc.u32 %v156, %v152
    %v159 = vsel %vm158, 1, 0
    %v160 = vadd.s32 %v156, %v152
    %v161 = vadd.s32 %v157, %v159
    %v162 = vadd.s32 %v161, %v151
    %v163 = vadd.s32 %v162, %v153
    %v164 = vand.u32 %v141, 65535
    %v165 = vshrl.u32 %v141, 16
    %v166 = vand.u32 %v136, 65535
    %v167 = vshrl.u32 %v136, 16
    %v168 = vmul.u32 %v164, %v166
    %v169 = vmul.u32 %v164, %v167
    %v170 = vmul.u32 %v165, %v166
    %v171 = vmul.u32 %v165, %v167
    %v172 = vshll.u32 %v169, 16
    %v173 = vshrl.u32 %v169, 16
    %v174 = vshll.u32 %v170, 16
    %v175 = vshrl.u32 %v170, 16
    %vm176 = vc.u32 %v168, %v172
    %v177 = vsel %vm176, 1, 0
    %v178 = vadd.s32 %v168, %v172
    %v179 = vadd.s32 %v171, %v177
    %vm180 = vc.u32 %v178, %v174
    %v181 = vsel %vm180, 1, 0
    %v182 = vadd.s32 %v178, %v174
    %v183 = vadd.s32 %v179, %v181
    %v184 = vadd.s32 %v183, %v173
    %v185 = vadd.s32 %v184, %v175
    %v186 = vmul.u32 %v141, %v132
    %v187 = vadd.s32 %v163, %v182
    %vm188 = vc.u32 %v163, %v182
    %v189 = vadd.s32 %v185, 1
    %v190 = vsel %vm188, %v189, %v185
    %v191 = vadd.s32 %v186, %v190
    %v192 = vadd.s32 %v191, 536870912
    %v193 = vshrl.u32 %v192, 30
    %v194 = vshll.u32 %v193, 30
    %v195 = vsub.s32 %v191, %v194
    %vm196 = vcmp.lt.s32.totalorder %v195, 0
    %v197 = vsub.s32 0, %v195
    %v198 = vsel %vm196, %v197, %v195
    %v199 = vclz %v198
    %v200 = vsub.s32 %v199, 2
    %vm201 = vcmp.gt.s32.totalorder 0, %v200
    %v202 = vsel %vm201, 0, %v200
    %v203 = vsub.s32 32, %v202
    %v204 = vshll.u32 %v195, %v202
    %v205 = vshrl.u32 %v187, %v203
    %v206 = vor.u32 %v204, %v205
    %v207 = vsub.s32 4294967266, %v202
    %v208 = vadd.s32 %v207, 127
    %v209 = vshll.u32 %v208, 23
    %v210 = vor.u32 4788187, %v209
    %v211 = vand.u32 2147483647, %v210
    %v213 = vcvt.s32.f32 %v206
    %v214 = vmul.f32 %v213, %v211
    %v215 = vxor.u32 %v214, 2147483648
    %v216 = vsel %vm95, %v215, %v214
    %v217 = vsub.s32 4, %v193
    %v218 = vsel %vm95, %v217, %v193
    %v219 = vsel %vm94, %v92, %v216
    %v220 = vsel %vm94, 0, %v218
    %v221 = vmul.f32 %v219, %v219
    %v222 = vmul.f32 %v221, -0.001358992
    %v223 = vadd.f32 %v222, 0.041655596
    %v224 = vmul.f32 %v221, %v223
    %v225 = vadd.f32 %v224, -0.4999988
    %v226 = vmul.f32 %v221, %v225
    %v227 = vadd.f32 1.0, %v226
    %v228 = vmul.f32 %v219, %v219
    %v229 = vmul.f32 %v228, -0.00019511016
    %v230 = vadd.f32 %v229, 0.008332121
    %v231 = vmul.f32 %v228, %v230
    %v232 = vadd.f32 %v231, -0.16666654
    %v233 = vmul.f32 %v228, %v232
    %v234 = vadd.f32 %v233, 1.0
    %v235 = vmul.f32 %v234, %v219
    %vm236 = vweird.f32 %v92
    %v237 = vand.u32 %v220, 3
    %vm238 = vcmp.lt.s32.totalorder %v237, 2
    %vm239 = vcmp.eq.s32.totalorder %v237, 0
    %v240 = vxor.u32 %v235, 2147483648
    %v241 = vsel %vm239, %v227, %v240
    %vm242 = vcmp.eq.s32.totalorder %v237, 2
    %v243 = vxor.u32 %v227, 2147483648
    %v244 = vsel %vm242, %v243, %v235
    %v245 = vsel %vm238, %v241, %v244
    %v246 = vsel %vm236, nan, %v245
    %v247 = vmul.f32 %v91, %v246
    %v248 = vand.u32 2147483647, %v92
    %vm249 = vcmp.le.f32.partialorder %v248, 0.7853982
    %vm250 = vcmp.lt.s32.totalorder %v92, 0
    %v251 = vand.u32 %v92, 2139095040
    %v252 = vshrl.u32 %v251, 23
    %v253 = vsub.s32 %v252, 127
    %v254 = vand.u32 2147483647, %v92
    %v255 = vand.u32 %v254, 8388607
    %v256 = vor.u32 %v255, 8388608
    %v257 = vsub.s32 0, %v256
    %v258 = vadd.s32 %v253, 1
    %vm259 = vcmp.gt.s32.totalorder %v258, 0
    %v260 = vsel %vm259, %v258, 0
    %v261 = vshrl.u32 %v260, 5
    %v262 = vand.u32 %v260, 31
    %v263 = vsub.s32 32, %v262
    %v264 = vshrl.u32 683565275, %v263
    %v265 = vshll.u32 683565275, %v262
    %v266 = vshrl.u32 2475754826, %v263
    %v267 = vor.u32 %v265, %v266
    %v268 = vshll.u32 2475754826, %v262
    %v269 = vshrl.u32 2131351028, %v263
    %v270 = vor.u32 %v268, %v269
    %v271 = vshll.u32 2131351028, %v262
    %v272 = vshrl.u32 2102212464, %v263
    %v273 = vor.u32 %v271, %v272
    %v274 = vshll.u32 2102212464, %v262
    %v275 = vshrl.u32 920167782, %v263
    %v276 = vor.u32 %v274, %v275
    %v277 = vshll.u32 920167782, %v262
    %v278 = vshrl.u32 1326507024, %v263
    %v279 = vor.u32 %v277, %v278
    %vm280 = vcmp.lt.s32.totalorder %v261, 1
    %vm281 = vcmp.lt.s32.totalorder %v261, 2
    %vm282 = vcmp.lt.s32.totalorder %v261, 3
    %vm283 = vcmp.lt.s32.totalorder %v261, 4
    %v284 = vsel %vm280, %v264, %v267
    %v285 = vsel %vm283, %v273, 2102212464
    %v286 = vsel %vm282, %v270, %v285
    %v287 = vsel %vm281, %v284, %v286
    %v288 = vsel %vm280, %v267, %v270
    %v289 = vsel %vm283, %v276, 920167782
    %v290 = vsel %vm282, %v273, %v289
    %v291 = vsel %vm281, %v288, %v290
    %v292 = vsel %vm280, %v270, %v273
    %v293 = vsel %vm283, %v279, 1326507024
    %v294 = vsel %vm282, %v276, %v293
    %v295 = vsel %vm281, %v292, %v294
    %v296 = vshll.u32 %v256, 8
    %v297 = vand.u32 %v296, 65535
    %v298 = vshrl.u32 %v296, 16
    %v299 = vand.u32 %v295, 65535
    %v300 = vshrl.u32 %v295, 16
    %v301 = vmul.u32 %v297, %v299
    %v302 = vmul.u32 %v297, %v300
    %v303 = vmul.u32 %v298, %v299
    %v304 = vmul.u32 %v298, %v300
    %v305 = vshll.u32 %v302, 16
    %v306 = vshrl.u32 %v302, 16
    %v307 = vshll.u32 %v303, 16
    %v308 = vshrl.u32 %v303, 16
    %vm309 = vc.u32 %v301, %v305
    %v310 = vsel %vm309, 1, 0
    %v311 = vadd.s32 %v301, %v305
    %v312 = vadd.s32 %v304, %v310
    %vm313 = vc.u32 %v311, %v307
    %v314 = vsel %vm313, 1, 0
    %v315 = vadd.s32 %v311, %v307
    %v316 = vadd.s32 %v312, %v314
    %v317 = vadd.s32 %v316, %v306
    %v318 = vadd.s32 %v317, %v308
    %v319 = vand.u32 %v296, 65535
    %v320 = vshrl.u32 %v296, 16
    %v321 = vand.u32 %v291, 65535
    %v322 = vshrl.u32 %v291, 16
    %v323 = vmul.u32 %v319, %v321
    %v324 = vmul.u32 %v319, %v322
    %v325 = vmul.u32 %v320, %v321
    %v326 = vmul.u32 %v320, %v322
    %v327 = vshll.u32 %v324, 16
    %v328 = vshrl.u32 %v324, 16
    %v329 = vshll.u32 %v325, 16
    %v330 = vshrl.u32 %v325, 16
    %vm331 = vc.u32 %v323, %v327
    %v332 = vsel %vm331, 1, 0
    %v333 = vadd.s32 %v323, %v327
    %v334 = vadd.s32 %v326, %v332
    %vm335 = vc.u32 %v333, %v329
    %v336 = vsel %vm335, 1, 0
    %v337 = vadd.s32 %v333, %v329
    %v338 = vadd.s32 %v334, %v336
    %v339 = vadd.s32 %v338, %v328
    %v340 = vadd.s32 %v339, %v330
    %v341 = vmul.u32 %v296, %v287
    %v342 = vadd.s32 %v318, %v337
    %vm343 = vc.u32 %v318, %v337
    %v344 = vadd.s32 %v340, 1
    %v345 = vsel %vm343, %v344, %v340
    %v346 = vadd.s32 %v341, %v345
    %v347 = vadd.s32 %v346, 536870912
    %v348 = vshrl.u32 %v347, 30
    %v349 = vshll.u32 %v348, 30
    %v350 = vsub.s32 %v346, %v349
    %vm351 = vcmp.lt.s32.totalorder %v350, 0
    %v352 = vsub.s32 0, %v350
    %v353 = vsel %vm351, %v352, %v350
    %v354 = vclz %v353
    %v355 = vsub.s32 %v354, 2
    %vm356 = vcmp.gt.s32.totalorder 0, %v355
    %v357 = vsel %vm356, 0, %v355
    %v358 = vsub.s32 32, %v357
    %v359 = vshll.u32 %v350, %v357
    %v360 = vshrl.u32 %v342, %v358
    %v361 = vor.u32 %v359, %v360
    %v362 = vsub.s32 4294967266, %v357
    %v363 = vadd.s32 %v362, 127
    %v364 = vshll.u32 %v363, 23
    %v365 = vor.u32 4788187, %v364
    %v366 = vand.u32 2147483647, %v365
    %v368 = vcvt.s32.f32 %v361
    %v369 = vmul.f32 %v368, %v366
    %v370 = vxor.u32 %v369, 2147483648
    %v371 = vsel %vm250, %v370, %v369
    %v372 = vsub.s32 4, %v348
    %v373 = vsel %vm250, %v372, %v348
    %v374 = vsel %vm249, %v92, %v371
    %v375 = vsel %vm249, 0, %v373
    %v376 = vmul.f32 %v374, %v374
    %v377 = vmul.f32 %v376, -0.001358992
    %v378 = vadd.f32 %v377, 0.041655596
    %v379 = vmul.f32 %v376, %v378
    %v380 = vadd.f32 %v379, -0.4999988
    %v381 = vmul.f32 %v376, %v380
    %v382 = vadd.f32 1.0, %v381
    %v383 = vmul.f32 %v374, %v374
    %v384 = vmul.f32 %v383, -0.00019511016
    %v385 = vadd.f32 %v384, 0.008332121
    %v386 = vmul.f32 %v383, %v385
    %v387 = vadd.f32 %v386, -0.16666654
    %v388 = vmul.f32 %v383, %v387
    %v389 = vadd.f32 %v388, 1.0
    %v390 = vmul.f32 %v389, %v374
    %vm391 = vweird.f32 %v92
    %v392 = vadd.s32 %v375, 3
    %v393 = vand.u32 %v392, 3
    %vm394 = vcmp.lt.s32.totalorder %v393, 2
    %vm395 = vcmp.eq.s32.totalorder %v393, 0
    %v396 = vxor.u32 %v390, 2147483648
    %v397 = vsel %vm395, %v382, %v396
    %vm398 = vcmp.eq.s32.totalorder %v393, 2
    %v399 = vxor.u32 %v382, 2147483648
    %v400 = vsel %vm398, %v399, %v390
    %v401 = vsel %vm394, %v397, %v400
    %v402 = vsel %vm391, nan, %v401
    %v403 = vmul.f32 %v91, %v402
    %v404 = vmul.f32 %v247, 0.1
    %v405 = vmul.f32 %v403, 0.1
    %v406 = vadd.f32 %v404, 0.5
    %v407 = vadd.f32 %v405, 0.5
    %v408 = vld [vmem:[#allocation4] sm:$0xff]
    %v409 = vld [vmem:[#allocation4 + $0x8] sm:$0xff]
    %v410 = vadd.f32 %v408, %v406
    %v411 = vadd.f32 %v409, %v407
    %412 = vst [vmem:[#allocation7] sm:$0xff] %v410
    %413 = vst [vmem:[#allocation7 + $0x8] sm:$0xff] %v411
    // Predicated region
    $region10: #{tpu_custom_call.1} parent=1 // pred_check
      _
    $region11: #{tpu_custom_call.1} parent=1 // pred_check_branch
      %415 = sbr.rel (0) target = $region13
    $region12: #{tpu_custom_call.1} parent=1 // pred_region
      %417 = vsyncadd [#allocation6], 0
      %s418 = sshll.u32 [#allocation7], 4
      %s419 = int_to_ptr.vmem [resolvable:$true] %s418
      %s420 = sshll.u32 %s2, 4
      %s421 = int_to_ptr.hbm [resolvable:$true] %s420
      %426 = dma.vmem_to_hbm [thread:$0]  %s419, 256, %s421, [#allocation6], 128, 128, 8
    $region13: #{tpu_custom_call.1} parent=1 // pred_fallthru
      _
    // Predicated region
    $region14: #{tpu_custom_call.1} parent=1 // pred_check
      _
    $region15: #{tpu_custom_call.1} parent=1 // pred_check_branch
      %428 = sbr.rel (0) target = $region17
    $region16: #{tpu_custom_call.1} parent=1 // pred_region
      %430 = dma.done [#allocation6], 256
    $region17: #{tpu_custom_call.1} parent=1 // pred_fallthru
      _
    %431 = vsyncpa [#allocation5], 1
    %432 = vsyncpa [#allocation6], 1

</llo_original>
